<compile_context>
chip_gen: v7x
topology: tpu7x:2x2x1
jax: 0.10.0
libtpu: 0.0.40
codegen_flags: <defaults>
</compile_context>

<pallas_src>
import math

import jax
import jax.numpy as jnp
from jax.experimental import pallas as pl
from jax.experimental.pallas import tpu as pltpu


def _round_up(x: int, m: int) -> int:
    return (x + m - 1) // m * m


def _cdiv(a: int, b: int) -> int:
    return (a + b - 1) // b


def _pos_encoding_kernel(inv_denom_ref, phase_ref, out_ref):
    """One (tile_rows, d_pad) tile of the sinusoid table.

    table[p, 2k]   = sin(p * inv_denom[2k])
    table[p, 2k+1] = cos(p * inv_denom[2k]) = sin(p * inv_denom[2k+1] + pi/2)
    inv_denom / phase are resident (1, d_pad) rows computed once on the host.
    """
    tile_rows, d_pad = out_ref.shape
    row0 = pl.program_id(0) * tile_rows
    pos = (jax.lax.broadcasted_iota(jnp.int32, (tile_rows, d_pad), 0)
           + row0).astype(jnp.float32)
    # One fma + one sin per element; stores are lane-dense (d_pad % 128 == 0).
    out_ref[...] = jnp.sin(pos * inv_denom_ref[...] + phase_ref[...])


class PositionalEncoding:
    """JAX/Pallas counterpart of the PyTorch PositionalEncoding module."""

    # Peak VMEM for the double-buffered output tile: 2 * tile_rows * d_pad * 4 B.
    # 12 MiB keeps us under v5e's 16 MiB default scoped VMEM (and far under
    # v6e/v7x's 32 MiB default) without touching vmem_limit_bytes.
    _VMEM_BUDGET_BYTES = 12 << 20

    def __init__(self, d_model: int, max_len: int):
        assert max_len < (1 << 24), "f32 position index loses exactness above 2^24"
        self.d_model = d_model
        self.max_len = max_len

        d_pad = _round_up(d_model, 128)                    # lane-dense stores
        rows8 = _round_up(max_len, 8)

        # Largest row tile (multiple of 8) that keeps the double-buffered
        # output under the VMEM budget.
        max_tile_rows = max(8, (self._VMEM_BUDGET_BYTES // (2 * d_pad * 4)) // 8 * 8)

        # Balanced tiles; force >= 2 grid steps (when the table allows it) so
        # the "parallel" axis can be split across v7x's two TensorCores.
        num_tiles = max(_cdiv(rows8, max_tile_rows), min(2, _cdiv(rows8, 8)))
        tile_rows = _round_up(_cdiv(max_len, num_tiles), 8)
        rows_pad = num_tiles * tile_rows

        # Per-column terms, computed once on the host (D exps total):
        #   inv_denom[j] = 10000 ** (-2*(j//2) / d_model)
        #   phase[j]     = (j % 2) * pi/2      (folds cos into sin)
        col = jnp.arange(d_pad, dtype=jnp.int32)
        parity = col & 1
        two_i = (col - parity).astype(jnp.float32)
        inv_denom = jnp.exp(two_i * jnp.float32(-math.log(10000.0) / d_model))[None, :]
        phase = (parity.astype(jnp.float32) * jnp.float32(math.pi / 2.0))[None, :]

        table = pl.pallas_call(
            _pos_encoding_kernel,
            out_shape=jax.ShapeDtypeStruct((rows_pad, d_pad), jnp.float32),
            grid=(num_tiles,),
            in_specs=[pl.BlockSpec((1, d_pad), lambda i: (0, 0)),
                      pl.BlockSpec((1, d_pad), lambda i: (0, 0))],
            out_specs=pl.BlockSpec((tile_rows, d_pad), lambda i: (i, 0)),
            compiler_params=pltpu.CompilerParams(
                dimension_semantics=("parallel",)),
        )(inv_denom, phase)

        # Cache the padded table (no init-time trim copy); forward slices it.
        self._table = table

    def __call__(self, x: jax.Array) -> jax.Array:
        # x: (B, S, F); only S = x.shape[1] is used (matches the PyTorch forward).
        seq_len = x.shape[1]
        assert seq_len <= self.max_len, "sequence length exceeds max_len"
        # Single slice of the cached padded table -> (1, S, d_model).  Fuses when
        # called under a consumer's jit.
        # TODO(synk): if callers compute `x + pe` right after, fuse that add (or
        # recompute pe on the fly: one fma + sin/elem) into the consumer kernel
        # to save the HBM round-trip; the module spec only returns the slice.
        enc = jax.lax.slice(self._table, (0, 0), (seq_len, self.d_model))
        return enc[None, :, :]


def _reference(seq_len: int, d_model: int) -> jnp.ndarray:
    """Pure-JAX reference reproducing the PyTorch table construction."""
    pos = jnp.arange(seq_len, dtype=jnp.float32)[:, None]
    _2i = jnp.arange(0, d_model, 2, dtype=jnp.float32)
    enc = jnp.zeros((seq_len, d_model), dtype=jnp.float32)
    enc = enc.at[:, 0::2].set(jnp.sin(pos / 10000.0 ** (_2i / d_model)))
    enc = enc.at[:, 1::2].set(jnp.cos(pos / 10000.0 ** (_2i / d_model)))
    return enc[None, :, :]


if __name__ == "__main__":
    # Small shapes consistent with the module: batch=2, seq=8, d_model=32.
    d_model = 32
    max_len = 16
    batch, seq_len = 2, 8

    key = jax.random.PRNGKey(0)
    # x's values are irrelevant (only its seq dim is used), built deterministically.
    x = jax.random.normal(key, (batch, seq_len, d_model), dtype=jnp.float32)

    module = PositionalEncoding(d_model=d_model, max_len=max_len)
    out = jax.block_until_ready(module(x))

    assert out.shape == (1, seq_len, d_model), out.shape
    ref = _reference(seq_len, d_model)
    # cos folded as sin(x + pi/2) and exp(-2i*ln(1e4)/d) vs pow() give ulp-level
    # f32 drift vs the reference; tolerance covers it.
    assert jnp.allclose(out, ref, atol=1e-4, rtol=1e-5), "mismatch vs reference"

    # Full-table check (all rows of the cached, padded table are correct).
    out_full = jax.block_until_ready(module(jnp.zeros((1, max_len, d_model))))
    ref_full = _reference(max_len, d_model)
    assert jnp.allclose(out_full, ref_full, atol=1e-4, rtol=1e-5)

    # Repeated calls with different seq_len reuse the cached table (no rebuild).
    out2 = jax.block_until_ready(module(x[:, :4, :]))
    assert out2.shape == (1, 4, d_model)
    assert jnp.allclose(out2, ref[:, :4, :], atol=1e-4, rtol=1e-5)

    print("KERNEL_OK")
</pallas_src>

<mosaic_0001>
module attributes {stable_mosaic.version = 11 : i64} {
  func.func @_pos_encoding_kernel(%arg0: i32, %arg1: memref<1x128xf32, #tpu.memory_space<vmem>>, %arg2: memref<1x128xf32, #tpu.memory_space<vmem>>, %arg3: memref<8x128xf32, #tpu.memory_space<vmem>>) attributes {dimension_semantics = [#tpu.dimension_semantics<parallel>], iteration_bounds = array<i64: 2>, scalar_prefetch = 0 : i64, scratch_operands = 0 : i64, tpu.core_type = #tpu.core_type<tc>, window_params = [{pipeline_mode = #tpu.pipeline_mode<synchronous>, transform_indices = @transform_0, window_bounds = array<i64: 1, 128>}, {pipeline_mode = #tpu.pipeline_mode<synchronous>, transform_indices = @transform_1, window_bounds = array<i64: 1, 128>}, {transform_indices = @transform_2, window_bounds = array<i64: 8, 128>}]} {
    %c8_i32 = arith.constant 8 : i32
    %0 = arith.muli %arg0, %c8_i32 : i32
    %1 = tpu.iota {dimensions = array<i32: 0>} : vector<8x128xi32>
    %2 = vector.broadcast %0 : i32 to vector<8x128xi32>
    %3 = arith.addi %1, %2 : vector<8x128xi32>
    %4 = arith.sitofp %3 : vector<8x128xi32> to vector<8x128xf32>
    %c0 = arith.constant 0 : index
    %c0_0 = arith.constant 0 : index
    %5 = vector.load %arg1[%c0, %c0_0] : memref<1x128xf32, #tpu.memory_space<vmem>>, vector<1x128xf32>
    %6 = vector.broadcast %5 : vector<1x128xf32> to vector<8x128xf32>
    %7 = arith.mulf %4, %6 : vector<8x128xf32>
    %c0_1 = arith.constant 0 : index
    %c0_2 = arith.constant 0 : index
    %8 = vector.load %arg2[%c0_1, %c0_2] : memref<1x128xf32, #tpu.memory_space<vmem>>, vector<1x128xf32>
    %9 = vector.broadcast %8 : vector<1x128xf32> to vector<8x128xf32>
    %10 = arith.addf %7, %9 : vector<8x128xf32>
    %11 = math.sin %10 : vector<8x128xf32>
    %c0_3 = arith.constant 0 : index
    %c0_4 = arith.constant 0 : index
    %12 = vector.load %arg3[%c0_3, %c0_4] : memref<8x128xf32, #tpu.memory_space<vmem>>, vector<8x128xf32>
    tpu.vector_store %arg3[%c0_3, %c0_4], %11 {strides = array<i32>} : memref<8x128xf32, #tpu.memory_space<vmem>>, vector<8x128xf32>,
    return
  }
  func.func @transform_0(%arg0: i32) -> (i32, i32) {
    %c0_i32 = arith.constant 0 : i32
    %c0_i32_0 = arith.constant 0 : i32
    %c0_i32_1 = arith.constant 0 : i32
    return %c0_i32, %c0_i32_0 : i32, i32
  }
  func.func @transform_1(%arg0: i32) -> (i32, i32) {
    %c0_i32 = arith.constant 0 : i32
    %c0_i32_0 = arith.constant 0 : i32
    %c0_i32_1 = arith.constant 0 : i32
    return %c0_i32, %c0_i32_0 : i32, i32
  }
  func.func @transform_2(%arg0: i32) -> (i32, i32) {
    %c0_i32 = arith.constant 0 : i32
    %c0_i32_0 = arith.constant 0 : i32
    return %arg0, %c0_i32 : i32, i32
  }
}

</mosaic_0001>

<llo_original>
// kernel: tpu_custom_call.1
$region0: #{tpu_custom_call.1}
  #allocation0 [shape = 'u32[]', space=smem, size = 0x4, offset = 0x4, fixed_abs, tag = 'smem constant byte address 0x4 - core index']
  #allocation1 [shape = 'u32[144,128]{1,0:T(1,128)}', space=vmem, size = 0x12000, scoped, tag = 'internal scratch']
  %s0 = inlined_call_operand.hbm [shape: f32[1,128], index: 0, kind: input, shape index: {}]
  %s1 = inlined_call_operand.vmem [shape: f32[1,128], index: 1, kind: input, shape index: {}]
  %s2 = inlined_call_operand.hbm [shape: f32[16,128], index: 2, kind: output, shape index: {}]
  %s3 = sld [smem:[#allocation0]]
  $region45: #{tpu_custom_call.1} parent=0
    _
  %s5 = ssub.s32 1, %s3
  %s6 = scalar_select 0, %s5, %s3
  $region1: #{tpu_custom_call.1} parent=0
    #allocation2 [shape = 'u8[512]{0}', space=vmem, size = 0x400, scoped, tag = 'input window, operand 0, single buffered']
    #allocation3 [shape = 's32[2]{0}', space=sflag, size = 0x8, scoped, tag = 'scoped memory for tpu_custom_call.1']
    #allocation4 [shape = 's32[2]{0}', space=sflag, size = 0x8, scoped, tag = 'scoped memory for tpu_custom_call.1']
    #allocation5 [shape = 'u8[8192]{0}', space=vmem, size = 0x2000, scoped, tag = 'output window, operand 0']
    %7 = vsyncpa [#allocation3], 0
    %8 = vsyncpa [#allocation4], 0
    %s9 = scalar_lea.sflag [#allocation4], 1
    %10 = vsyncpa %s9, 0
    loop: start=0, step=1, limit=4
    $region2: #{tpu_custom_call.1} parent=1 // loop_pre_header
      _
    $region3: #{tpu_custom_call.1} parent=1 // loop_header
      %s12 = sphi 0, %s16
      %p13 = scmp.ge.s32.totalorder %s12, 4
      %s20 = sphi 0, %s20
      %s22 = sphi 0, %s20
      %s23 = sphi 0, %s22
      %s37 = sphi 0, %s23
      %s41 = sphi 0, %s41
      %s43 = sphi 0, %s41
      %s44 = sphi 0, %s43
      %s58 = sphi 0, %s44
      %s64 = sphi 0, %s66
      %s67 = sphi 0, %s64
      %s68 = sphi 0, %s67
      %s84 = sphi 0, %s68
    $region4: #{tpu_custom_call.1} parent=1 // loop_header_branch
      %15 = sbr.rel (%p13) target = $region8
    $region5: #{tpu_custom_call.1} parent=1 // loop_body
      %s17 = ssub.s32 %s12, 1
      %s18 = ssub.s32 %s12, 2
      %s19 = sadd.s32 %s12, 1
      %s21 = sadd.s32 %s20, 1
      %p24 = scmp.eq.s32.totalorder %s12, 1
      %p25 = scmp.ne.s32.totalorder %s20, %s22
      %p26 = scmp.eq.s32.totalorder %s12, 0
      %p27 = por %p25, %p26
      %p28 = scmp.ne.s32.totalorder %s20, %s22
      %p29 = scmp.eq.s32.totalorder %s17, 1
      %p30 = por %p28, %p29
      %p31 = scmp.ne.s32.totalorder %s22, %s23
      %p32 = scmp.eq.s32.totalorder %s17, 0
      %p33 = por %p31, %p32
      %p34 = scmp.ne.s32.totalorder %s22, %s23
      %p35 = scmp.eq.s32.totalorder %s18, 1
      %p36 = por %p34, %p35
      %p38 = scmp.ne.s32.totalorder %s23, %s37
      %p39 = scmp.eq.s32.totalorder %s18, 0
      %p40 = por %p38, %p39
      %s42 = sadd.s32 %s41, 1
      %p45 = scmp.eq.s32.totalorder %s12, 1
      %p46 = scmp.ne.s32.totalorder %s41, %s43
      %p47 = scmp.eq.s32.totalorder %s12, 0
      %p48 = por %p46, %p47
      %p49 = scmp.ne.s32.totalorder %s41, %s43
      %p50 = scmp.eq.s32.totalorder %s17, 1
      %p51 = por %p49, %p50
      %p52 = scmp.ne.s32.totalorder %s43, %s44
      %p53 = scmp.eq.s32.totalorder %s17, 0
      %p54 = por %p52, %p53
      %p55 = scmp.ne.s32.totalorder %s43, %s44
      %p56 = scmp.eq.s32.totalorder %s18, 1
      %p57 = por %p55, %p56
      %p59 = scmp.ne.s32.totalorder %s44, %s58
      %p60 = scmp.eq.s32.totalorder %s18, 0
      %p61 = por %p59, %p60
      %s62 = ssub.s32 %s12, %s19
      %p63 = scmp.eq.s32.totalorder %s62, 0
      %s65 = sadd.s32 %s64, 1
      %s66 = scalar_select %p63, %s64, %s65
      %p69 = pneg %p63
      %p70 = scmp.eq.s32.totalorder %s12, 1
      %p71 = por %p69, %p70
      %p72 = scmp.ne.s32.totalorder %s64, %s67
      %p73 = scmp.eq.s32.totalorder %s12, 0
      %p74 = por %p72, %p73
      %p75 = scmp.ne.s32.totalorder %s64, %s67
      %p76 = scmp.eq.s32.totalorder %s17, 1
      %p77 = por %p75, %p76
      %p78 = scmp.ne.s32.totalorder %s67, %s68
      %p79 = scmp.eq.s32.totalorder %s17, 0
      %p80 = por %p78, %p79
      %p81 = scmp.ne.s32.totalorder %s67, %s68
      %p82 = scmp.eq.s32.totalorder %s18, 1
      %p83 = por %p81, %p82
      %p85 = scmp.ne.s32.totalorder %s68, %s84
      %p86 = scmp.eq.s32.totalorder %s18, 0
      %p87 = por %p85, %p86
      %p88 = scmp.le.s32.totalorder 1, %s12
      %p89 = scmp.lt.s32.totalorder %s12, 3
      %p90 = pnand %p88, %p89
      %p91 = pneg %p90
      // Predicated region
      $region9: #{tpu_custom_call.1} parent=5 // pred_check
        _
      $region10: #{tpu_custom_call.1} parent=5 // pred_check_branch
        %93 = sbr.rel (%p90) target = $region12
      $region11: #{tpu_custom_call.1} parent=5 // pred_region
        %s94 = ssub.s32 %s12, 1
        // Predicated region
        $region13: #{tpu_custom_call.1} parent=11 // pred_check
          %p95 = pneg %p33
        $region14: #{tpu_custom_call.1} parent=11 // pred_check_branch
          %97 = sbr.rel (%p95) target = $region16
        $region15: #{tpu_custom_call.1} parent=11 // pred_region
          %s99 = ssub.s32 16, 16
          %100 = vsyncadd [#allocation3], %s99
          %s102 = sshll.u32 [#allocation2], 4
          %s103 = int_to_ptr.vmem [resolvable:$true] %s102
          %105 = dma.hbm_to_vmem [thread:$0]  %s0, 16, %s103, [#allocation3]
        $region16: #{tpu_custom_call.1} parent=11 // pred_fallthru
          _
        // Predicated region
        $region17: #{tpu_custom_call.1} parent=11 // pred_check
          %p106 = pneg %p54
        $region18: #{tpu_custom_call.1} parent=11 // pred_check_branch
          %108 = sbr.rel (%p106) target = $region20
        $region19: #{tpu_custom_call.1} parent=11 // pred_region
          _
        $region20: #{tpu_custom_call.1} parent=11 // pred_fallthru
          _
      $region12: #{tpu_custom_call.1} parent=5 // pred_fallthru
        _
      %p109 = scmp.lt.s32.totalorder %s12, 2
      // Predicated region
      $region21: #{tpu_custom_call.1} parent=5 // pred_check
        %p110 = pneg %p109
      $region22: #{tpu_custom_call.1} parent=5 // pred_check_branch
        %112 = sbr.rel (%p110) target = $region24
      $region23: #{tpu_custom_call.1} parent=5 // pred_region
        _
      $region24: #{tpu_custom_call.1} parent=5 // pred_fallthru
        _
      %p113 = scmp.le.s32.totalorder 1, %s12
      %p114 = scmp.lt.s32.totalorder %s12, 3
      %p115 = pnand %p113, %p114
      %p116 = pneg %p115
      // Predicated region
      $region25: #{tpu_custom_call.1} parent=5 // pred_check
        _
      $region26: #{tpu_custom_call.1} parent=5 // pred_check_branch
        %118 = sbr.rel (%p115) target = $region28
      $region27: #{tpu_custom_call.1} parent=5 // pred_region
        %s119 = ssub.s32 %s12, 1
        // Predicated region
        $region29: #{tpu_custom_call.1} parent=27 // pred_check
          %p120 = pneg %p33
        $region30: #{tpu_custom_call.1} parent=27 // pred_check_branch
          %122 = sbr.rel (%p120) target = $region32
        $region31: #{tpu_custom_call.1} parent=27 // pred_region
          %123 = dma.done [#allocation3], 16
        $region32: #{tpu_custom_call.1} parent=27 // pred_fallthru
          _
        %p124 = pneg %p33
        %p125 = pneg %p30
        %p126 = pneg %p54
        %p127 = pneg %p51
        %p128 = pneg %p80
        %p129 = pneg %p77
        %s130 = sand.u32 %s67, 1
        %s131 = scalar_lea.sflag [#allocation4], %s130
        %s132 = sand.u32 %s67, 1
        %s133 = smul.addr %s132, 8
        %s134 = scalar_lea.vmem [#allocation5], %s133
        %s135 = smul.u32 %s17, 8
        %v136 = vlaneseq
        %v137 = vshrl.u32 %v136, 7
        %v138 = vstv %s135
        %v139 = vadd.s32 %v137, %v138
        %v140 = vcvt.s32.f32 %v139
        %v141 = vld [vmem:[#allocation2] sm:$0x1]
        %v143 = vlaneseq
        %v144 = vshrl.u32 %v143, 7
        %v145 = vsub.s32 0, %v144
        %v146 = vrot.slane %v141, %v145
        %v148 = vmul.f32 %v140, %v146
        %v149 = vld [vmem:[%s1] sm:$0x1]
        %v151 = vlaneseq
        %v152 = vshrl.u32 %v151, 7
        %v153 = vsub.s32 0, %v152
        %v154 = vrot.slane %v149, %v153
        %v156 = vadd.f32 %v148, %v154
        %v157 = vand.u32 2147483647, %v156
        %vm158 = vcmp.le.f32.partialorder %v157, 0.7853982
        %vm159 = vcmp.lt.s32.totalorder %v156, 0
        %v160 = vand.u32 %v156, 2139095040
        %v161 = vshrl.u32 %v160, 23
        %v162 = vsub.s32 %v161, 127
        %v163 = vand.u32 2147483647, %v156
        %v164 = vand.u32 %v163, 8388607
        %v165 = vor.u32 %v164, 8388608
        %v166 = vsub.s32 0, %v165
        %v167 = vadd.s32 %v162, 1
        %vm168 = vcmp.gt.s32.totalorder %v167, 0
        %v169 = vsel %vm168, %v167, 0
        %v170 = vshrl.u32 %v169, 5
        %v171 = vand.u32 %v169, 31
        %v172 = vsub.s32 32, %v171
        %v173 = vshrl.u32 683565275, %v172
        %v174 = vshll.u32 683565275, %v171
        %v175 = vshrl.u32 2475754826, %v172
        %v176 = vor.u32 %v174, %v175
        %v177 = vshll.u32 2475754826, %v171
        %v178 = vshrl.u32 2131351028, %v172
        %v179 = vor.u32 %v177, %v178
        %v180 = vshll.u32 2131351028, %v171
        %v181 = vshrl.u32 2102212464, %v172
        %v182 = vor.u32 %v180, %v181
        %v183 = vshll.u32 2102212464, %v171
        %v184 = vshrl.u32 920167782, %v172
        %v185 = vor.u32 %v183, %v184
        %v186 = vshll.u32 920167782, %v171
        %v187 = vshrl.u32 1326507024, %v172
        %v188 = vor.u32 %v186, %v187
        %vm189 = vcmp.lt.s32.totalorder %v170, 1
        %vm190 = vcmp.lt.s32.totalorder %v170, 2
        %vm191 = vcmp.lt.s32.totalorder %v170, 3
        %vm192 = vcmp.lt.s32.totalorder %v170, 4
        %v193 = vsel %vm189, %v173, %v176
        %v194 = vsel %vm192, %v182, 2102212464
        %v195 = vsel %vm191, %v179, %v194
        %v196 = vsel %vm190, %v193, %v195
        %v197 = vsel %vm189, %v176, %v179
        %v198 = vsel %vm192, %v185, 920167782
        %v199 = vsel %vm191, %v182, %v198
        %v200 = vsel %vm190, %v197, %v199
        %v201 = vsel %vm189, %v179, %v182
        %v202 = vsel %vm192, %v188, 1326507024
        %v203 = vsel %vm191, %v185, %v202
        %v204 = vsel %vm190, %v201, %v203
        %v205 = vshll.u32 %v165, 8
        %v206 = vmul.u32.u64.compose %v205, %v204
        %v207 = vextract.low.u32 %v206
        %v208 = vextract.high.u32 %v206
        %v209 = vmul.u32.u64.compose %v205, %v200
        %v210 = vextract.low.u32 %v209
        %v211 = vextract.high.u32 %v209
        %v212 = vmul.u32 %v205, %v196
        %v213 = vadd.s32 %v208, %v210
        %vm214 = vc.u32 %v208, %v210
        %v215 = vadd.s32 %v211, 1
        %v216 = vsel %vm214, %v215, %v211
        %v217 = vadd.s32 %v212, %v216
        %v218 = vadd.s32 %v217, 536870912
        %v219 = vshrl.u32 %v218, 30
        %v220 = vshll.u32 %v219, 30
        %v221 = vsub.s32 %v217, %v220
        %vm222 = vcmp.lt.s32.totalorder %v221, 0
        %v223 = vsub.s32 0, %v221
        %v224 = vsel %vm222, %v223, %v221
        %v225 = vclz %v224
        %v226 = vsub.s32 %v225, 2
        %vm227 = vcmp.gt.s32.totalorder 0, %v226
        %v228 = vsel %vm227, 0, %v226
        %v229 = vsub.s32 32, %v228
        %v230 = vshll.u32 %v221, %v228
        %v231 = vshrl.u32 %v213, %v229
        %v232 = vor.u32 %v230, %v231
        %v233 = vsub.s32 4294967266, %v228
        %v234 = vadd.s32 %v233, 127
        %v235 = vshll.u32 %v234, 23
        %v236 = vor.u32 4788187, %v235
        %v237 = vand.u32 2147483647, %v236
        %v239 = vcvt.s32.f32 %v232
        %v240 = vmul.f32 %v239, %v237
        %v241 = vxor.u32 %v240, 2147483648
        %v242 = vsel %vm159, %v241, %v240
        %v243 = vsub.s32 4, %v219
        %v244 = vsel %vm159, %v243, %v219
        %v245 = vsel %vm158, %v156, %v242
        %v246 = vsel %vm158, 0, %v244
        %v247 = vcosq.f32.pop %v245
        %v248 = vsinq.f32.pop %v245
        %vm249 = vweird.f32 %v156
        %v250 = vadd.s32 %v246, 3
        %v251 = vand.u32 %v250, 3
        %vm252 = vcmp.lt.s32.totalorder %v251, 2
        %vm253 = vcmp.eq.s32.totalorder %v251, 0
        %v254 = vxor.u32 %v248, 2147483648
        %v255 = vsel %vm253, %v247, %v254
        %vm256 = vcmp.eq.s32.totalorder %v251, 2
        %v257 = vxor.u32 %v247, 2147483648
        %v258 = vsel %vm256, %v257, %v248
        %v259 = vsel %vm252, %v255, %v258
        %v260 = vsel %vm249, nan, %v259
        %261 = vst [vmem:[%s134] sm:$0xff] %v260
        %s262 = sand.u32 %s67, 1
        %s263 = scalar_lea.sflag [#allocation4], %s262
        %s264 = sand.u32 %s67, 1
        %s265 = smul.addr %s264, 8
        %s266 = scalar_lea.vmem [#allocation5], %s265
        // Predicated region
        $region33: #{tpu_custom_call.1} parent=27 // pred_check
          %p267 = pneg %p77
        $region34: #{tpu_custom_call.1} parent=27 // pred_check_branch
          %269 = sbr.rel (%p267) target = $region36
        $region35: #{tpu_custom_call.1} parent=27 // pred_region
          %s271 = ssub.s32 128, 128
          %272 = vsyncadd %s263, %s271
          %s273 = smul.addr %s17, 128
          %s274 = scalar_lea.hbm %s2, %s273
          %s276 = sshll.u32 %s266, 4
          %s277 = int_to_ptr.vmem [resolvable:$true] %s276
          %279 = dma.vmem_to_hbm [thread:$0]  %s277, 128, %s274, %s263
        $region36: #{tpu_custom_call.1} parent=27 // pred_fallthru
          _
      $region28: #{tpu_custom_call.1} parent=5 // pred_fallthru
        _
      %p280 = scmp.le.s32.totalorder 2, %s12
      // Predicated region
      $region37: #{tpu_custom_call.1} parent=5 // pred_check
        %p281 = pneg %p280
      $region38: #{tpu_custom_call.1} parent=5 // pred_check_branch
        %283 = sbr.rel (%p281) target = $region40
      $region39: #{tpu_custom_call.1} parent=5 // pred_region
        %s284 = ssub.s32 %s12, 2
        // Predicated region
        $region41: #{tpu_custom_call.1} parent=39 // pred_check
          %p285 = pneg %p83
        $region42: #{tpu_custom_call.1} parent=39 // pred_check_branch
          %287 = sbr.rel (%p285) target = $region44
        $region43: #{tpu_custom_call.1} parent=39 // pred_region
          %s288 = sand.u32 %s68, 1
          %s289 = scalar_lea.sflag [#allocation4], %s288
          %s290 = sand.u32 %s68, 1
          %s291 = smul.addr %s290, 8
          %s292 = scalar_lea.vmem [#allocation5], %s291
          %293 = dma.done %s289, 128
        $region44: #{tpu_custom_call.1} parent=39 // pred_fallthru
          _
      $region40: #{tpu_custom_call.1} parent=5 // pred_fallthru
        _
    $region6: #{tpu_custom_call.1} parent=1 // loop_footer
      %s16 = sadd.s32 1, %s12
    $region7: #{tpu_custom_call.1} parent=1 // loop_footer_branch
      %11 = sbr.rel target = $region3
    $region8: #{tpu_custom_call.1} parent=1 // loop_exit
      _
    %294 = vsyncpa [#allocation3], 1
    %s295 = scalar_lea.sflag [#allocation3], 1
    %296 = vsyncpa %s295, 1
    %297 = vsyncpa [#allocation4], 1
    %s298 = scalar_lea.sflag [#allocation4], 1
    %299 = vsyncpa %s298, 1

</llo_original>
